<compile_context>
chip_gen: v7x
topology: tpu7x:2x2x1
jax: 0.10.0
libtpu: 0.0.40
codegen_flags: <defaults>
</compile_context>

<pallas_src>
import math
import functools

import jax
import jax.numpy as jnp
from jax.experimental import pallas as pl
from jax.experimental.pallas import tpu as pltpu


def _round_up(x, m):
    return ((x + m - 1) // m) * m


def _choose_tl(L, D):
    """Sequence tile length: smaller for huge hidden dims (v7x VMEM), bigger otherwise."""
    if D >= 4096:
        tl = 256
    elif D >= 2048:
        tl = 512
    else:
        tl = 1024
    return min(tl, _round_up(L, 8))


def _head_kernel_factory(eps):
    def head_kernel(x_ref, sp1_ref, shift_ref, w_ref, b_ref, o_ref):
        # x_ref:     (TL, D)     bf16
        # sp1_ref:   (1, D)      f32   (1 + scale)
        # shift_ref: (1, D)      f32
        # w_ref:     (D, O_pad)  bf16
        # b_ref:     (1, O_pad)  f32
        # o_ref:     (TL, O_pad) bf16
        x = x_ref[...].astype(jnp.float32)                     # (TL, D) f32
        inv_d = jnp.float32(1.0 / x.shape[-1])

        # One-pass LayerNorm stats: mean and E[x^2] from a single traversal.
        mean = jnp.sum(x, axis=-1, keepdims=True) * inv_d
        ex2 = jnp.sum(x * x, axis=-1, keepdims=True) * inv_d
        var = jnp.maximum(ex2 - mean * mean, 0.0)
        normed = (x - mean) * jax.lax.rsqrt(var + eps)          # f32

        # Modulation in f32; single down-cast for the MXU input.
        y = (normed * sp1_ref[...] + shift_ref[...]).astype(jnp.bfloat16)  # (TL, D)

        # Linear on the MXU, f32 accumulation, f32 bias add.
        out = jnp.dot(y, w_ref[...], preferred_element_type=jnp.float32)  # (TL, O_pad)
        out = out + b_ref[...]
        o_ref[...] = out.astype(o_ref.dtype)

    return head_kernel


def head_forward(x, t_mod, modulation, w, b, eps):
    """
    x          : (B, L, D)  bf16
    t_mod      : (B, 1, D)  bf16
    modulation : (1, 2, D)  bf16
    w          : (D, O)     bf16   (transpose of torch nn.Linear weight)
    b          : (O,)       bf16
    """
    B, L, D = x.shape
    O = w.shape[1]

    # --- glue: shift / (1+scale) from modulation + t_mod (trivial broadcast add) ---
    mod = modulation + t_mod                                   # (B, 2, D) bf16 (torch rounding)
    shift = mod[:, 0:1, :].astype(jnp.float32)                 # (B, 1, D) f32
    scale_p1 = (jnp.bfloat16(1) + mod[:, 1:2, :]).astype(jnp.float32)  # (B, 1, D) f32

    # --- lane-dense output: pad O to a multiple of 128 ---
    O_pad = _round_up(O, 128)
    w_pad = jnp.zeros((D, O_pad), dtype=w.dtype).at[:, :O].set(w)
    b_pad = jnp.zeros((1, O_pad), dtype=jnp.float32).at[0, :O].set(b.astype(jnp.float32))

    # --- tile the sequence dimension ---
    TL = _choose_tl(L, D)
    L_pad = _round_up(L, TL)
    if L_pad != L:
        x = jnp.pad(x, ((0, 0), (0, L_pad - L), (0, 0)))
    n_l = L_pad // TL

    # VMEM budget estimate (double-buffered tiles + f32 temporaries), capped for v7x.
    est = (2 * TL * D * 2            # x tiles (bf16, double buffered)
           + 2 * TL * O_pad * 2      # out tiles
           + 2 * D * O_pad * 2       # weight
           + 2 * O_pad * 4 + 4 * D * 4 * 2
           + 3 * TL * D * 4)         # f32 intermediates (x, normed, y)
    vmem_limit = int(min(max(2 * est, 32 * 1024 * 1024), 48 * 1024 * 1024))

    kernel = _head_kernel_factory(eps)

    out_full = pl.pallas_call(
        kernel,
        out_shape=jax.ShapeDtypeStruct((B, L_pad, O_pad), x.dtype),
        grid_spec=pltpu.PrefetchScalarGridSpec(
            num_scalar_prefetch=0,
            grid=(B, n_l),
            in_specs=[
                pl.BlockSpec((None, TL, D), lambda bi, li: (bi, li, 0)),   # x
                pl.BlockSpec((None, 1, D), lambda bi, li: (bi, 0, 0)),     # 1 + scale
                pl.BlockSpec((None, 1, D), lambda bi, li: (bi, 0, 0)),     # shift
                pl.BlockSpec((D, O_pad), lambda bi, li: (0, 0)),           # weight (padded)
                pl.BlockSpec((1, O_pad), lambda bi, li: (0, 0)),           # bias   (padded, f32)
            ],
            out_specs=pl.BlockSpec((None, TL, O_pad), lambda bi, li: (bi, li, 0)),
        ),
        compiler_params=pltpu.CompilerParams(
            dimension_semantics=("parallel", "parallel"),
            vmem_limit_bytes=vmem_limit,
        ),
    )(x, scale_p1, shift, w_pad, b_pad)

    # Strip sequence / lane padding.
    return out_full[:, :L, :O]


def head_forward_ref(x, t_mod, modulation, w, b, eps):
    """Plain-JAX reference mirroring the PyTorch forward."""
    mod = modulation + t_mod
    shift, scale = mod[:, 0:1, :], mod[:, 1:2, :]
    xf = x.astype(jnp.float32)
    mean = jnp.mean(xf, axis=-1, keepdims=True)
    var = jnp.mean((xf - mean) ** 2, axis=-1, keepdims=True)
    normed = ((xf - mean) * jax.lax.rsqrt(var + eps)).astype(jnp.bfloat16)
    y = normed * (jnp.bfloat16(1) + scale) + shift
    out = jnp.dot(y.astype(jnp.bfloat16), w, preferred_element_type=jnp.float32)
    out = out + b.astype(jnp.float32)
    return out.astype(x.dtype)


if __name__ == "__main__":
    # Small shapes consistent with the module.
    B, L = 2, 8
    dim = 32
    out_dim = 4
    patch_size = (1, 2, 2)
    eps = 1e-6
    O = out_dim * math.prod(patch_size)     # 16

    key = jax.random.PRNGKey(0)
    kx, kt, km, kw, kb = jax.random.split(key, 5)

    x = jax.random.normal(kx, (B, L, dim), dtype=jnp.float32).astype(jnp.bfloat16)
    t_mod = jax.random.normal(kt, (B, 1, dim), dtype=jnp.float32).astype(jnp.bfloat16)

    # Parameters (deterministic init, matching nn module shapes):
    #   modulation: (1, 2, dim) ~ randn / sqrt(dim)
    #   head.weight: (O, dim) -> stored transposed as (dim, O) for the kernel
    #   head.bias:   (O,)
    modulation = (jax.random.normal(km, (1, 2, dim), dtype=jnp.float32)
                  / math.sqrt(dim)).astype(jnp.bfloat16)
    bound = 1.0 / math.sqrt(dim)
    w_t = jax.random.uniform(kw, (O, dim), minval=-bound, maxval=bound,
                             dtype=jnp.float32).astype(jnp.bfloat16)
    b = jax.random.uniform(kb, (O,), minval=-bound, maxval=bound,
                           dtype=jnp.float32).astype(jnp.bfloat16)
    w = jnp.transpose(w_t)                  # (dim, O)

    out = head_forward(x, t_mod, modulation, w, b, eps)
    out = jax.block_until_ready(out)

    ref = head_forward_ref(x, t_mod, modulation, w, b, eps)
    assert out.shape == (B, L, O), out.shape
    assert out.dtype == jnp.bfloat16, out.dtype
    assert jnp.allclose(out.astype(jnp.float32), ref.astype(jnp.float32),
                        atol=2e-2, rtol=2e-2), "mismatch vs reference"

    print("KERNEL_OK")
</pallas_src>

<mosaic_0001>
module attributes {stable_mosaic.version = 11 : i64} {
  func.func @head_kernel(%arg0: i32, %arg1: i32, %arg2: memref<1x8x32xbf16, #tpu.memory_space<vmem>>, %arg3: memref<1x1x32xf32, #tpu.memory_space<vmem>>, %arg4: memref<1x1x32xf32, #tpu.memory_space<vmem>>, %arg5: memref<32x128xbf16, #tpu.memory_space<vmem>>, %arg6: memref<1x128xf32, #tpu.memory_space<vmem>>, %arg7: memref<1x8x128xbf16, #tpu.memory_space<vmem>>) attributes {dimension_semantics = [#tpu.dimension_semantics<parallel>, #tpu.dimension_semantics<parallel>], iteration_bounds = array<i64: 2, 1>, scalar_prefetch = 0 : i64, scratch_operands = 0 : i64, tpu.core_type = #tpu.core_type<tc>, window_params = [{transform_indices = @transform_0, window_bounds = array<i64: 1, 8, 32>}, {transform_indices = @transform_1, window_bounds = array<i64: 1, 1, 32>}, {transform_indices = @transform_2, window_bounds = array<i64: 1, 1, 32>}, {pipeline_mode = #tpu.pipeline_mode<synchronous>, transform_indices = @transform_3, window_bounds = array<i64: 32, 128>}, {pipeline_mode = #tpu.pipeline_mode<synchronous>, transform_indices = @transform_4, window_bounds = array<i64: 1, 128>}, {transform_indices = @transform_5, window_bounds = array<i64: 1, 8, 128>}]} {
    %c0 = arith.constant 0 : index
    %c0_0 = arith.constant 0 : index
    %c0_1 = arith.constant 0 : index
    %0 = vector.load %arg2[%c0, %c0_0, %c0_1] : memref<1x8x32xbf16, #tpu.memory_space<vmem>>, vector<1x8x32xbf16>
    %1 = vector.shape_cast %0 : vector<1x8x32xbf16> to vector<8x32xbf16>
    %2 = arith.extf %1 : vector<8x32xbf16> to vector<8x32xf32>
    %cst = arith.constant dense<0.000000e+00> : vector<8xf32>
    %3 = vector.multi_reduction <add>, %2, %cst [1] : vector<8x32xf32> to vector<8xf32>
    %4 = vector.shape_cast %3 : vector<8xf32> to vector<8x1xf32>
    %cst_2 = arith.constant 3.125000e-02 : f32
    %5 = vector.broadcast %cst_2 : f32 to vector<8x1xf32>
    %6 = arith.mulf %4, %5 : vector<8x1xf32>
    %7 = arith.mulf %2, %2 : vector<8x32xf32>
    %cst_3 = arith.constant dense<0.000000e+00> : vector<8xf32>
    %8 = vector.multi_reduction <add>, %7, %cst_3 [1] : vector<8x32xf32> to vector<8xf32>
    %9 = vector.shape_cast %8 : vector<8xf32> to vector<8x1xf32>
    %cst_4 = arith.constant 3.125000e-02 : f32
    %10 = vector.broadcast %cst_4 : f32 to vector<8x1xf32>
    %11 = arith.mulf %9, %10 : vector<8x1xf32>
    %12 = arith.mulf %6, %6 : vector<8x1xf32>
    %13 = arith.subf %11, %12 : vector<8x1xf32>
    %cst_5 = arith.constant 0.000000e+00 : f32
    %14 = vector.broadcast %cst_5 : f32 to vector<8x1xf32>
    %15 = arith.maximumf %13, %14 : vector<8x1xf32>
    %16 = vector.broadcast %6 : vector<8x1xf32> to vector<8x32xf32>
    %17 = arith.subf %2, %16 : vector<8x32xf32>
    %cst_6 = arith.constant 9.99999997E-7 : f32
    %18 = vector.broadcast %cst_6 : f32 to vector<8x1xf32>
    %19 = arith.addf %15, %18 : vector<8x1xf32>
    %20 = math.rsqrt %19 : vector<8x1xf32>
    %21 = vector.broadcast %20 : vector<8x1xf32> to vector<8x32xf32>
    %22 = arith.mulf %17, %21 : vector<8x32xf32>
    %c0_7 = arith.constant 0 : index
    %c0_8 = arith.constant 0 : index
    %c0_9 = arith.constant 0 : index
    %23 = vector.load %arg3[%c0_7, %c0_8, %c0_9] : memref<1x1x32xf32, #tpu.memory_space<vmem>>, vector<1x1x32xf32>
    %24 = vector.shape_cast %23 : vector<1x1x32xf32> to vector<1x32xf32>
    %25 = vector.broadcast %24 : vector<1x32xf32> to vector<8x32xf32>
    %26 = arith.mulf %22, %25 : vector<8x32xf32>
    %c0_10 = arith.constant 0 : index
    %c0_11 = arith.constant 0 : index
    %c0_12 = arith.constant 0 : index
    %27 = vector.load %arg4[%c0_10, %c0_11, %c0_12] : memref<1x1x32xf32, #tpu.memory_space<vmem>>, vector<1x1x32xf32>
    %28 = vector.shape_cast %27 : vector<1x1x32xf32> to vector<1x32xf32>
    %29 = vector.broadcast %28 : vector<1x32xf32> to vector<8x32xf32>
    %30 = arith.addf %26, %29 : vector<8x32xf32>
    %31 = arith.truncf %30 : vector<8x32xf32> to vector<8x32xbf16>
    %c0_13 = arith.constant 0 : index
    %c0_14 = arith.constant 0 : index
    %32 = vector.load %arg5[%c0_13, %c0_14] : memref<32x128xbf16, #tpu.memory_space<vmem>>, vector<32x128xbf16>
    %cst_15 = arith.constant dense<0.000000e+00> : vector<8x128xf32>
    %33 = tpu.matmul %31, %32, %cst_15 {dimension_numbers = #tpu.dot_dimension_numbers<[1], [0], [0], [1], [0, 0, 1, 1], [], []>} : vector<8x32xbf16>, vector<32x128xbf16>, vector<8x128xf32> -> vector<8x128xf32>
    %c0_16 = arith.constant 0 : index
    %c0_17 = arith.constant 0 : index
    %34 = vector.load %arg6[%c0_16, %c0_17] : memref<1x128xf32, #tpu.memory_space<vmem>>, vector<1x128xf32>
    %35 = vector.broadcast %34 : vector<1x128xf32> to vector<8x128xf32>
    %36 = arith.addf %33, %35 : vector<8x128xf32>
    %37 = arith.truncf %36 : vector<8x128xf32> to vector<8x128xbf16>
    %c0_18 = arith.constant 0 : index
    %c0_19 = arith.constant 0 : index
    %c0_20 = arith.constant 0 : index
    %38 = vector.load %arg7[%c0_18, %c0_19, %c0_20] : memref<1x8x128xbf16, #tpu.memory_space<vmem>>, vector<1x8x128xbf16>
    %39 = vector.shape_cast %38 : vector<1x8x128xbf16> to vector<8x128xbf16>
    %40 = vector.shape_cast %37 : vector<8x128xbf16> to vector<1x8x128xbf16>
    tpu.vector_store %arg7[%c0_18, %c0_19, %c0_20], %40 {strides = array<i32>} : memref<1x8x128xbf16, #tpu.memory_space<vmem>>, vector<1x8x128xbf16>,
    return
  }
  func.func @transform_0(%arg0: i32, %arg1: i32) -> (i32, i32, i32) {
    %c0_i32 = arith.constant 0 : i32
    %c0_i32_0 = arith.constant 0 : i32
    return %arg0, %arg1, %c0_i32 : i32, i32, i32
  }
  func.func @transform_1(%arg0: i32, %arg1: i32) -> (i32, i32, i32) {
    %c0_i32 = arith.constant 0 : i32
    %c0_i32_0 = arith.constant 0 : i32
    %c0_i32_1 = arith.constant 0 : i32
    return %arg0, %c0_i32, %c0_i32_0 : i32, i32, i32
  }
  func.func @transform_2(%arg0: i32, %arg1: i32) -> (i32, i32, i32) {
    %c0_i32 = arith.constant 0 : i32
    %c0_i32_0 = arith.constant 0 : i32
    %c0_i32_1 = arith.constant 0 : i32
    return %arg0, %c0_i32, %c0_i32_0 : i32, i32, i32
  }
  func.func @transform_3(%arg0: i32, %arg1: i32) -> (i32, i32) {
    %c0_i32 = arith.constant 0 : i32
    %c0_i32_0 = arith.constant 0 : i32
    %c0_i32_1 = arith.constant 0 : i32
    return %c0_i32, %c0_i32_0 : i32, i32
  }
  func.func @transform_4(%arg0: i32, %arg1: i32) -> (i32, i32) {
    %c0_i32 = arith.constant 0 : i32
    %c0_i32_0 = arith.constant 0 : i32
    %c0_i32_1 = arith.constant 0 : i32
    return %c0_i32, %c0_i32_0 : i32, i32
  }
  func.func @transform_5(%arg0: i32, %arg1: i32) -> (i32, i32, i32) {
    %c0_i32 = arith.constant 0 : i32
    %c0_i32_0 = arith.constant 0 : i32
    return %arg0, %arg1, %c0_i32 : i32, i32, i32
  }
}

</mosaic_0001>

<llo_original>
// kernel: tpu_custom_call.1
$region0: #{tpu_custom_call.1}
  #allocation0 [shape = 'u32[]', space=smem, size = 0x4, offset = 0x4, fixed_abs, tag = 'smem constant byte address 0x4 - core index']
  #allocation1 [shape = 'u32[144,128]{1,0:T(1,128)}', space=vmem, size = 0x12000, scoped, tag = 'internal scratch']
  %s0 = inlined_call_operand.hbm [shape: bf16[2,8,32], index: 0, kind: input, shape index: {}]
  %s1 = inlined_call_operand.vmem [shape: f32[2,1,32], index: 1, kind: input, shape index: {}]
  %s2 = inlined_call_operand.vmem [shape: f32[2,1,32], index: 2, kind: input, shape index: {}]
  %s3 = inlined_call_operand.hbm [shape: bf16[32,128], index: 3, kind: input, shape index: {}]
  %s4 = inlined_call_operand.vmem [shape: f32[1,128], index: 4, kind: input, shape index: {}]
  %s5 = inlined_call_operand.hbm [shape: bf16[2,8,128], index: 5, kind: output, shape index: {}]
  %s6 = sld [smem:[#allocation0]]
  $region61: #{tpu_custom_call.1} parent=0
    _
  %s8 = ssub.s32 1, %s6
  %s9 = scalar_select 0, %s8, %s6
  $region1: #{tpu_custom_call.1} parent=0
    #allocation2 [shape = 'u8[4096]{0}', space=vmem, size = 0x1000, scoped, tag = 'input window, operand 0']
    #allocation3 [shape = 's32[2]{0}', space=sflag, size = 0x8, scoped, tag = 'scoped memory for tpu_custom_call.1']
    #allocation4 [shape = 's32[2]{0}', space=sflag, size = 0x8, scoped, tag = 'scoped memory for tpu_custom_call.1']
    #allocation5 [shape = 'u8[8192]{0}', space=vmem, size = 0x2000, scoped, tag = 'input window, operand 3, single buffered']
    #allocation6 [shape = 's32[1]{0}', space=sflag, size = 0x4, scoped, tag = 'scoped memory for tpu_custom_call.1']
    #allocation7 [shape = 'u8[4096]{0}', space=vmem, size = 0x1000, scoped, tag = 'output window, operand 0']
    %10 = vsyncpa [#allocation3], 0
    %s11 = scalar_lea.sflag [#allocation3], 1
    %12 = vsyncpa %s11, 0
    %13 = vsyncpa [#allocation6], 0
    %14 = vsyncpa [#allocation4], 0
    %s15 = scalar_lea.sflag [#allocation4], 1
    %16 = vsyncpa %s15, 0
    loop: start=0, step=1, limit=4
    $region2: #{tpu_custom_call.1} parent=1 // loop_pre_header
      _
    $region3: #{tpu_custom_call.1} parent=1 // loop_header
      %s18 = sphi 0, %s22
      %p19 = scmp.ge.s32.totalorder %s18, 4
      %s25 = sphi 0, %s37
      %s26 = sphi 0, %s33
      %s27 = sphi 0, %s25
      %s28 = sphi 0, %s26
      %s29 = sphi 0, %s27
      %s30 = sphi 0, %s28
      %s42 = sphi 0, %s44
      %s45 = sphi 0, %s42
      %s46 = sphi 0, %s45
      %s62 = sphi 0, %s46
      %s68 = sphi 0, %s70
      %s71 = sphi 0, %s68
      %s72 = sphi 0, %s71
      %s88 = sphi 0, %s72
      %s94 = sphi 0, %s96
      %s97 = sphi 0, %s94
      %s98 = sphi 0, %s97
      %s114 = sphi 0, %s98
      %s118 = sphi 0, %s118
      %s120 = sphi 0, %s118
      %s121 = sphi 0, %s120
      %s135 = sphi 0, %s121
      %s139 = sphi 0, %s139
      %s141 = sphi 0, %s139
      %s142 = sphi 0, %s141
      %s156 = sphi 0, %s142
      %s164 = sphi 0, %s166
      %s167 = sphi 0, %s164
      %s168 = sphi 0, %s167
      %s184 = sphi 0, %s168
    $region4: #{tpu_custom_call.1} parent=1 // loop_header_branch
      %21 = sbr.rel (%p19) target = $region8
    $region5: #{tpu_custom_call.1} parent=1 // loop_body
      %s23 = ssub.s32 %s18, 1
      %s24 = ssub.s32 %s18, 2
      %s31 = sadd.s32 1, %s26
      %p32 = scmp.ge.s32.totalorder %s31, 1
      %s33 = scalar_select %p32, 0, %s31
      %s34 = sadd.s32 1, %s25
      %s35 = scalar_select %p32, %s34, %s25
      %p36 = scmp.ge.s32.totalorder %s35, 2
      %s37 = scalar_select %p36, 0, %s35
      %s38 = ssub.s32 %s25, %s37
      %s39 = ssub.s32 %s26, %s33
      %s40 = sor.u32 %s38, %s39
      %p41 = scmp.eq.s32.totalorder %s40, 0
      %s43 = sadd.s32 %s42, 1
      %s44 = scalar_select %p41, %s42, %s43
      %p47 = pneg %p41
      %p48 = scmp.eq.s32.totalorder %s18, 1
      %p49 = por %p47, %p48
      %p50 = scmp.ne.s32.totalorder %s42, %s45
      %p51 = scmp.eq.s32.totalorder %s18, 0
      %p52 = por %p50, %p51
      %p53 = scmp.ne.s32.totalorder %s42, %s45
      %p54 = scmp.eq.s32.totalorder %s23, 1
      %p55 = por %p53, %p54
      %p56 = scmp.ne.s32.totalorder %s45, %s46
      %p57 = scmp.eq.s32.totalorder %s23, 0
      %p58 = por %p56, %p57
      %p59 = scmp.ne.s32.totalorder %s45, %s46
      %p60 = scmp.eq.s32.totalorder %s24, 1
      %p61 = por %p59, %p60
      %p63 = scmp.ne.s32.totalorder %s46, %s62
      %p64 = scmp.eq.s32.totalorder %s24, 0
      %p65 = por %p63, %p64
      %s66 = ssub.s32 %s25, %s37
      %p67 = scmp.eq.s32.totalorder %s66, 0
      %s69 = sadd.s32 %s68, 1
      %s70 = scalar_select %p67, %s68, %s69
      %p73 = pneg %p67
      %p74 = scmp.eq.s32.totalorder %s18, 1
      %p75 = por %p73, %p74
      %p76 = scmp.ne.s32.totalorder %s68, %s71
      %p77 = scmp.eq.s32.totalorder %s18, 0
      %p78 = por %p76, %p77
      %p79 = scmp.ne.s32.totalorder %s68, %s71
      %p80 = scmp.eq.s32.totalorder %s23, 1
      %p81 = por %p79, %p80
      %p82 = scmp.ne.s32.totalorder %s71, %s72
      %p83 = scmp.eq.s32.totalorder %s23, 0
      %p84 = por %p82, %p83
      %p85 = scmp.ne.s32.totalorder %s71, %s72
      %p86 = scmp.eq.s32.totalorder %s24, 1
      %p87 = por %p85, %p86
      %p89 = scmp.ne.s32.totalorder %s72, %s88
      %p90 = scmp.eq.s32.totalorder %s24, 0
      %p91 = por %p89, %p90
      %s92 = ssub.s32 %s25, %s37
      %p93 = scmp.eq.s32.totalorder %s92, 0
      %s95 = sadd.s32 %s94, 1
      %s96 = scalar_select %p93, %s94, %s95
      %p99 = pneg %p93
      %p100 = scmp.eq.s32.totalorder %s18, 1
      %p101 = por %p99, %p100
      %p102 = scmp.ne.s32.totalorder %s94, %s97
      %p103 = scmp.eq.s32.totalorder %s18, 0
      %p104 = por %p102, %p103
      %p105 = scmp.ne.s32.totalorder %s94, %s97
      %p106 = scmp.eq.s32.totalorder %s23, 1
      %p107 = por %p105, %p106
      %p108 = scmp.ne.s32.totalorder %s97, %s98
      %p109 = scmp.eq.s32.totalorder %s23, 0
      %p110 = por %p108, %p109
      %p111 = scmp.ne.s32.totalorder %s97, %s98
      %p112 = scmp.eq.s32.totalorder %s24, 1
      %p113 = por %p111, %p112
      %p115 = scmp.ne.s32.totalorder %s98, %s114
      %p116 = scmp.eq.s32.totalorder %s24, 0
      %p117 = por %p115, %p116
      %s119 = sadd.s32 %s118, 1
      %p122 = scmp.eq.s32.totalorder %s18, 1
      %p123 = scmp.ne.s32.totalorder %s118, %s120
      %p124 = scmp.eq.s32.totalorder %s18, 0
      %p125 = por %p123, %p124
      %p126 = scmp.ne.s32.totalorder %s118, %s120
      %p127 = scmp.eq.s32.totalorder %s23, 1
      %p128 = por %p126, %p127
      %p129 = scmp.ne.s32.totalorder %s120, %s121
      %p130 = scmp.eq.s32.totalorder %s23, 0
      %p131 = por %p129, %p130
      %p132 = scmp.ne.s32.totalorder %s120, %s121
      %p133 = scmp.eq.s32.totalorder %s24, 1
      %p134 = por %p132, %p133
      %p136 = scmp.ne.s32.totalorder %s121, %s135
      %p137 = scmp.eq.s32.totalorder %s24, 0
      %p138 = por %p136, %p137
      %s140 = sadd.s32 %s139, 1
      %p143 = scmp.eq.s32.totalorder %s18, 1
      %p144 = scmp.ne.s32.totalorder %s139, %s141
      %p145 = scmp.eq.s32.totalorder %s18, 0
      %p146 = por %p144, %p145
      %p147 = scmp.ne.s32.totalorder %s139, %s141
      %p148 = scmp.eq.s32.totalorder %s23, 1
      %p149 = por %p147, %p148
      %p150 = scmp.ne.s32.totalorder %s141, %s142
      %p151 = scmp.eq.s32.totalorder %s23, 0
      %p152 = por %p150, %p151
      %p153 = scmp.ne.s32.totalorder %s141, %s142
      %p154 = scmp.eq.s32.totalorder %s24, 1
      %p155 = por %p153, %p154
      %p157 = scmp.ne.s32.totalorder %s142, %s156
      %p158 = scmp.eq.s32.totalorder %s24, 0
      %p159 = por %p157, %p158
      %s160 = ssub.s32 %s25, %s37
      %s161 = ssub.s32 %s26, %s33
      %s162 = sor.u32 %s160, %s161
      %p163 = scmp.eq.s32.totalorder %s162, 0
      %s165 = sadd.s32 %s164, 1
      %s166 = scalar_select %p163, %s164, %s165
      %p169 = pneg %p163
      %p170 = scmp.eq.s32.totalorder %s18, 1
      %p171 = por %p169, %p170
      %p172 = scmp.ne.s32.totalorder %s164, %s167
      %p173 = scmp.eq.s32.totalorder %s18, 0
      %p174 = por %p172, %p173
      %p175 = scmp.ne.s32.totalorder %s164, %s167
      %p176 = scmp.eq.s32.totalorder %s23, 1
      %p177 = por %p175, %p176
      %p178 = scmp.ne.s32.totalorder %s167, %s168
      %p179 = scmp.eq.s32.totalorder %s23, 0
      %p180 = por %p178, %p179
      %p181 = scmp.ne.s32.totalorder %s167, %s168
      %p182 = scmp.eq.s32.totalorder %s24, 1
      %p183 = por %p181, %p182
      %p185 = scmp.ne.s32.totalorder %s168, %s184
      %p186 = scmp.eq.s32.totalorder %s24, 0
      %p187 = por %p185, %p186
      %p188 = scmp.le.s32.totalorder 1, %s18
      %p189 = scmp.lt.s32.totalorder %s18, 3
      %p190 = pnand %p188, %p189
      %p191 = pneg %p190
      // Predicated region
      $region9: #{tpu_custom_call.1} parent=5 // pred_check
        _
      $region10: #{tpu_custom_call.1} parent=5 // pred_check_branch
        %193 = sbr.rel (%p190) target = $region12
      $region11: #{tpu_custom_call.1} parent=5 // pred_region
        %s194 = ssub.s32 %s18, 1
        // Predicated region
        $region13: #{tpu_custom_call.1} parent=11 // pred_check
          %p195 = pneg %p131
        $region14: #{tpu_custom_call.1} parent=11 // pred_check_branch
          %197 = sbr.rel (%p195) target = $region16
        $region15: #{tpu_custom_call.1} parent=11 // pred_region
          %s199 = ssub.s32 256, 256
          %200 = vsyncadd [#allocation6], %s199
          %s201 = sshll.u32 [#allocation5], 4
          %s202 = int_to_ptr.vmem [resolvable:$true] %s201
          %207 = dma.hbm_to_vmem [thread:$0]  %s3, 256, %s202, [#allocation6], 64, 64, 4
        $region16: #{tpu_custom_call.1} parent=11 // pred_fallthru
          _
        // Predicated region
        $region17: #{tpu_custom_call.1} parent=11 // pred_check
          %p208 = pneg %p152
        $region18: #{tpu_custom_call.1} parent=11 // pred_check_branch
          %210 = sbr.rel (%p208) target = $region20
        $region19: #{tpu_custom_call.1} parent=11 // pred_region
          _
        $region20: #{tpu_custom_call.1} parent=11 // pred_fallthru
          _
      $region12: #{tpu_custom_call.1} parent=5 // pred_fallthru
        _
      %p211 = scmp.lt.s32.totalorder %s18, 2
      // Predicated region
      $region21: #{tpu_custom_call.1} parent=5 // pred_check
        %p212 = pneg %p211
      $region22: #{tpu_custom_call.1} parent=5 // pred_check_branch
        %214 = sbr.rel (%p212) target = $region24
      $region23: #{tpu_custom_call.1} parent=5 // pred_region
        // Predicated region
        $region25: #{tpu_custom_call.1} parent=23 // pred_check
          %p215 = pneg %p52
        $region26: #{tpu_custom_call.1} parent=23 // pred_check_branch
          %217 = sbr.rel (%p215) target = $region28
        $region27: #{tpu_custom_call.1} parent=23 // pred_region
          %s218 = sand.u32 %s42, 1
          %s219 = scalar_lea.sflag [#allocation3], %s218
          %s220 = sand.u32 %s42, 1
          %s221 = smul.addr %s220, 4
          %s222 = scalar_lea.vmem [#allocation2], %s221
          %s224 = ssub.s32 64, 64
          %225 = vsyncadd %s219, %s224
          %s226 = sadd.s32 %s26, %s25
          %s227 = smul.addr %s226, 64
          %s228 = scalar_lea.hbm %s0, %s227
          %s230 = sshll.u32 %s222, 4
          %s231 = int_to_ptr.vmem [resolvable:$true] %s230
          %233 = dma.hbm_to_vmem [thread:$0]  %s228, 64, %s231, %s219
        $region28: #{tpu_custom_call.1} parent=23 // pred_fallthru
          _
        // Predicated region
        $region29: #{tpu_custom_call.1} parent=23 // pred_check
          %p234 = pneg %p78
        $region30: #{tpu_custom_call.1} parent=23 // pred_check_branch
          %236 = sbr.rel (%p234) target = $region32
        $region31: #{tpu_custom_call.1} parent=23 // pred_region
          %p237 = scmp.lt.s32.totalorder %s25, 1
          %s238 = scalar_select %p237, %s25, 1
          %s239 = scalar_lea.vmem %s1, %s238
        $region32: #{tpu_custom_call.1} parent=23 // pred_fallthru
          _
        // Predicated region
        $region33: #{tpu_custom_call.1} parent=23 // pred_check
          %p240 = pneg %p104
        $region34: #{tpu_custom_call.1} parent=23 // pred_check_branch
          %242 = sbr.rel (%p240) target = $region36
        $region35: #{tpu_custom_call.1} parent=23 // pred_region
          %p243 = scmp.lt.s32.totalorder %s25, 1
          %s244 = scalar_select %p243, %s25, 1
          %s245 = scalar_lea.vmem %s2, %s244
        $region36: #{tpu_custom_call.1} parent=23 // pred_fallthru
          _
      $region24: #{tpu_custom_call.1} parent=5 // pred_fallthru
        _
      %p246 = scmp.le.s32.totalorder 1, %s18
      %p247 = scmp.lt.s32.totalorder %s18, 3
      %p248 = pnand %p246, %p247
      %p249 = pneg %p248
      // Predicated region
      $region37: #{tpu_custom_call.1} parent=5 // pred_check
        _
      $region38: #{tpu_custom_call.1} parent=5 // pred_check_branch
        %251 = sbr.rel (%p248) target = $region40
      $region39: #{tpu_custom_call.1} parent=5 // pred_region
        %s252 = ssub.s32 %s18, 1
        %s253 = sand.u32 %s45, 1
        %s254 = scalar_lea.sflag [#allocation3], %s253
        %s255 = sand.u32 %s45, 1
        %s256 = smul.addr %s255, 4
        %s257 = scalar_lea.vmem [#allocation2], %s256
        // Predicated region
        $region41: #{tpu_custom_call.1} parent=39 // pred_check
          %p258 = pneg %p58
        $region42: #{tpu_custom_call.1} parent=39 // pred_check_branch
          %260 = sbr.rel (%p258) target = $region44
        $region43: #{tpu_custom_call.1} parent=39 // pred_region
          %261 = dma.done %s254, 64
        $region44: #{tpu_custom_call.1} parent=39 // pred_fallthru
          _
        // Predicated region
        $region45: #{tpu_custom_call.1} parent=39 // pred_check
          %p262 = pneg %p131
        $region46: #{tpu_custom_call.1} parent=39 // pred_check_branch
          %264 = sbr.rel (%p262) target = $region48
        $region47: #{tpu_custom_call.1} parent=39 // pred_region
          %265 = dma.done [#allocation6], 256
        $region48: #{tpu_custom_call.1} parent=39 // pred_fallthru
          _
        %s266 = sand.u32 %s45, 1
        %s267 = scalar_lea.sflag [#allocation3], %s266
        %s268 = sand.u32 %s45, 1
        %s269 = smul.addr %s268, 4
        %s270 = scalar_lea.vmem [#allocation2], %s269
        %p271 = pneg %p58
        %p272 = pneg %p55
        %p273 = scmp.lt.s32.totalorder %s27, 1
        %s274 = scalar_select %p273, %s27, 1
        %s275 = scalar_lea.vmem %s1, %s274
        %p276 = pneg %p84
        %p277 = pneg %p81
        %p278 = scmp.lt.s32.totalorder %s27, 1
        %s279 = scalar_select %p278, %s27, 1
        %s280 = scalar_lea.vmem %s2, %s279
        %p281 = pneg %p110
        %p282 = pneg %p107
        %p283 = pneg %p131
        %p284 = pneg %p128
        %p285 = pneg %p152
        %p286 = pneg %p149
        %p287 = pneg %p180
        %p288 = pneg %p177
        %s289 = sand.u32 %s167, 1
        %s290 = scalar_lea.sflag [#allocation4], %s289
        %s291 = sand.u32 %s167, 1
        %s292 = smul.addr %s291, 4
        %s293 = scalar_lea.vmem [#allocation7], %s292
        %p294 = scmp.lt.s32.totalorder %s27, 1
        %s295 = scalar_select %p294, %s27, 1
        %s296 = scalar_lea.vmem %s1, %s295
        %p297 = scmp.lt.s32.totalorder %s27, 1
        %s298 = scalar_select %p297, %s27, 1
        %s299 = scalar_lea.vmem %s2, %s298
        %v301 = vld [vmem:[%s257] sm:$0xf]
        %v302 = vunpack.c.l.bf16 %v301
        %vm303 = vcmask 261120
        %v304 = vsel %vm303, %v302, 0.0
        %305 = vadd.xlane.f32.xlu0 %v304
        %v306 = vpop.xlane.xlu0 %305
        %v307 = vmul.f32 %v306, 0.03125
        %v308 = vmul.f32 %v302, %v302
        %v309 = vsel %vm303, %v308, 0.0
        %310 = vadd.xlane.f32.xlu0 %v309
        %v311 = vpop.xlane.xlu0 %310
        %v312 = vmul.f32 %v311, 0.03125
        %v313 = vmul.f32 %v307, %v307
        %v314 = vsub.f32 %v312, %v313
        %v315 = vmax.f32 %v314, 0.0
        %v316 = vsub.f32 %v302, %v307
        %v317 = vadd.f32 %v315, 1e-06
        %v318 = vrsqrt.pop %v317
        %v319 = vmul.f32 %v316, %v318
        %v320 = vld [vmem:[%s296] sm:$0x1]
        %v322 = vlaneseq
        %v323 = vshrl.u32 %v322, 7
        %v324 = vsub.s32 0, %v323
        %v325 = vrot.slane %v320, %v324
        %v327 = vmul.f32 %v319, %v325
        %v328 = vld [vmem:[%s299] sm:$0x1]
        %v330 = vlaneseq
        %v331 = vshrl.u32 %v330, 7
        %v332 = vsub.s32 0, %v331
        %v333 = vrot.slane %v328, %v332
        %v335 = vadd.f32 %v327, %v333
        %v336 = vpack.c.bf16 %v335, %v335
        %v337 = vld [vmem:[#allocation5] sm:$0xf]
        %v338 = vld [vmem:[#allocation5 + $0x4] sm:$0xf]
        %v339 = vld [vmem:[#allocation5 + $0x8] sm:$0xf]
        %v340 = vld [vmem:[#allocation5 + $0xc] sm:$0xf]
        %v341 = vld [vmem:[%s4] sm:$0x1]
        %v343 = vlaneseq
        %v344 = vshrl.u32 %v343, 7
        %v345 = vsub.s32 0, %v344
        %v346 = vrot.slane %v341, %v345
        %v352 = vunpack.c.l.b16 %v337
        %v353 = vunpack.c.l.b16 %v338
        %v354 = vunpack.c.l.b16 %v339
        %v355 = vunpack.c.l.b16 %v340
        %v356 = vpack.c.b16 %v353, %v352
        %v357 = vpack.c.b16 %v355, %v354
        %v361 = vsel %vm303, %v336, 0
        %363 = vmatprep.subr.bf16.mxu0 0
        %364 = vmatpush1.bf16.msra.mxu0 %v356
        %365 = vmatprep.subr.bf16.mxu0 0
        %366 = vmatpush1.bf16.msra.mxu0 %v357
        %367 = vmatprep.subr.bf16.mxu0 0
        %368 = vmatpush1.bf16.msra.mxu0 0
        %369 = vmatprep.subr.bf16.mxu0 0
        %370 = vmatpush1.bf16.msra.mxu0 0
        %371 = vmatprep.subr.bf16.mxu0 0
        %372 = vmatpush1.bf16.msra.mxu0 0
        %373 = vmatprep.subr.bf16.mxu0 0
        %374 = vmatpush1.bf16.msra.mxu0 0
        %375 = vmatprep.subr.bf16.mxu0 0
        %376 = vmatpush1.bf16.msra.mxu0 0
        %377 = vmatprep.subr.bf16.mxu0 0
        %378 = vmatpush1.bf16.msra.mxu0 0
        %379 = vmatprep.subr.bf16.mxu0 0
        %380 = vmatpush1.bf16.msra.mxu0 0
        %381 = vmatprep.subr.bf16.mxu0 0
        %382 = vmatpush1.bf16.msra.mxu0 0
        %383 = vmatprep.subr.bf16.mxu0 0
        %384 = vmatpush1.bf16.msra.mxu0 0
        %385 = vmatprep.subr.bf16.mxu0 0
        %386 = vmatpush1.bf16.msra.mxu0 0
        %387 = vmatprep.subr.bf16.mxu0 0
        %388 = vmatpush1.bf16.msra.mxu0 0
        %389 = vmatprep.subr.bf16.mxu0 0
        %390 = vmatpush1.bf16.msra.mxu0 0
        %391 = vmatprep.subr.bf16.mxu0 0
        %392 = vmatpush1.bf16.msra.mxu0 0
        %393 = vmatprep.subr.bf16.mxu0 0
        %394 = vmatpush1.bf16.msra.mxu0 0
        %395 = vmatprep.mubr.bf16.mxu0 0
        %396 = vmatmul.mubr.bf16.gmra.mrb[0].mxu0 %v361
        %v397 = vpop.f32.mrb[0].mxu0
        %v398 = vadd.f32 %v346, %v397
        %v399 = vpop.f32.mrb[0].mxu0
        %v400 = vpop.f32.mrb[0].mxu0
        %v401 = vpop.f32.mrb[0].mxu0
        %402 = vdwg.mxu0
        %v403 = vpack.c.bf16 %v398, %v398
        %404 = vst [vmem:[%s293] sm:$0xf] %v403
        %s405 = sand.u32 %s167, 1
        %s406 = scalar_lea.sflag [#allocation4], %s405
        %s407 = sand.u32 %s167, 1
        %s408 = smul.addr %s407, 4
        %s409 = scalar_lea.vmem [#allocation7], %s408
        // Predicated region
        $region49: #{tpu_custom_call.1} parent=39 // pred_check
          %p410 = pneg %p177
        $region50: #{tpu_custom_call.1} parent=39 // pred_check_branch
          %412 = sbr.rel (%p410) target = $region52
        $region51: #{tpu_custom_call.1} parent=39 // pred_region
          %s414 = ssub.s32 64, 64
          %415 = vsyncadd %s406, %s414
          %s416 = sadd.s32 %s28, %s27
          %s417 = smul.addr %s416, 64
          %s418 = scalar_lea.hbm %s5, %s417
          %s420 = sshll.u32 %s409, 4
          %s421 = int_to_ptr.vmem [resolvable:$true] %s420
          %423 = dma.vmem_to_hbm [thread:$0]  %s421, 64, %s418, %s406
        $region52: #{tpu_custom_call.1} parent=39 // pred_fallthru
          _
      $region40: #{tpu_custom_call.1} parent=5 // pred_fallthru
        _
      %p424 = scmp.le.s32.totalorder 2, %s18
      // Predicated region
      $region53: #{tpu_custom_call.1} parent=5 // pred_check
        %p425 = pneg %p424
      $region54: #{tpu_custom_call.1} parent=5 // pred_check_branch
        %427 = sbr.rel (%p425) target = $region56
      $region55: #{tpu_custom_call.1} parent=5 // pred_region
        %s428 = ssub.s32 %s18, 2
        // Predicated region
        $region57: #{tpu_custom_call.1} parent=55 // pred_check
          %p429 = pneg %p183
        $region58: #{tpu_custom_call.1} parent=55 // pred_check_branch
          %431 = sbr.rel (%p429) target = $region60
        $region59: #{tpu_custom_call.1} parent=55 // pred_region
          %s432 = sand.u32 %s168, 1
          %s433 = scalar_lea.sflag [#allocation4], %s432
          %s434 = sand.u32 %s168, 1
          %s435 = smul.addr %s434, 4
          %s436 = scalar_lea.vmem [#allocation7], %s435
          %437 = dma.done %s433, 64
        $region60: #{tpu_custom_call.1} parent=55 // pred_fallthru
          _
      $region56: #{tpu_custom_call.1} parent=5 // pred_fallthru
        _
    $region6: #{tpu_custom_call.1} parent=1 // loop_footer
      %s22 = sadd.s32 1, %s18
    $region7: #{tpu_custom_call.1} parent=1 // loop_footer_branch
      %17 = sbr.rel target = $region3
    $region8: #{tpu_custom_call.1} parent=1 // loop_exit
      _
    %438 = vsyncpa [#allocation3], 1
    %s439 = scalar_lea.sflag [#allocation3], 1
    %440 = vsyncpa %s439, 1
    %441 = vsyncpa [#allocation6], 1
    %442 = vsyncpa [#allocation4], 1
    %s443 = scalar_lea.sflag [#allocation4], 1
    %444 = vsyncpa %s443, 1

</llo_original>
